<compile_context>
chip_gen: v5e
topology: v5e:2x2
jax: 0.10.0
libtpu: 0.0.40
codegen_flags: <defaults>
</compile_context>

<pallas_src>
import functools

import jax
import jax.numpy as jnp
from jax.experimental import pallas as pl
from jax.experimental.pallas import tpu as pltpu


def _svd_l_partial_kernel(x_ref, sum_ref, sq_ref, *, total_n, tile_n,
                          steps_per_part, need_mask):
    # x_ref: (tile_n, C) input tile (original dtype) in VMEM
    # sum_ref / sq_ref: (1, 8, C) f32 output blocks, VMEM-resident across the
    #   inner grid axis (index_map depends only on the part axis).
    p = pl.program_id(0)
    i = pl.program_id(1)

    @pl.when(i == 0)
    def _init():
        sum_ref[...] = jnp.zeros(sum_ref.shape, jnp.float32)
        sq_ref[...] = jnp.zeros(sq_ref.shape, jnp.float32)

    x = x_ref[...].astype(jnp.float32)  # cast once in vregs (bf16-friendly DMA)
    tile_rows, c = x.shape

    def accumulate(xv):
        if tile_rows % 8 == 0:
            # Keep 8 per-sublane partial rows: pure VALU vreg adds on the hot
            # path; the cross-sublane collapse happens once in the epilogue.
            xr = xv.reshape(tile_rows // 8, 8, c)
            sum_ref[0] = sum_ref[0] + jnp.sum(xr, axis=0)
            sq_ref[0] = sq_ref[0] + jnp.sum(xr * xr, axis=0)
        else:
            # Tiny single-block case (N < 8 or not 8-aligned full-array block).
            sum_ref[0, 0:1, :] = sum_ref[0, 0:1, :] + jnp.sum(xv, axis=0, keepdims=True)
            sq_ref[0, 0:1, :] = sq_ref[0, 0:1, :] + jnp.sum(xv * xv, axis=0, keepdims=True)

    if need_mask:
        # Only edge / padding tiles pay for the mask; full tiles stay unmasked.
        row_start = (p * steps_per_part + i) * tile_n
        is_edge = row_start + tile_rows > total_n

        @pl.when(is_edge)
        def _masked():
            rows = jax.lax.broadcasted_iota(jnp.int32, (tile_rows, 1), 0) + row_start
            accumulate(jnp.where(rows < total_n, x, jnp.float32(0.0)))

        @pl.when(jnp.logical_not(is_edge))
        def _full():
            accumulate(x)
    else:
        accumulate(x)


def _svd_l_finalize_kernel(sum_ref, sq_ref, o_ref, *, total_n, lambda_loss_var):
    # (P, 8, C) partials -> scalar loss (O(C) work, runs once).
    n_f = jnp.float32(total_n)
    total = jnp.sum(jnp.sum(sum_ref[...], axis=0), axis=0, keepdims=True)   # (1, C)
    totsq = jnp.sum(jnp.sum(sq_ref[...], axis=0), axis=0, keepdims=True)    # (1, C)
    mean = total / n_f
    # Unbiased per-feature variance; N == 1 gives inf/nan, matching torch.var.
    # TODO(synk): single-pass sum/sumsq variance; switch to per-tile M2 +
    # Chan's parallel combine if inputs can carry offsets with |mean| >> std.
    var = (totsq - n_f * mean * mean) / jnp.float32(total_n - 1)
    mean_var = jnp.sum(var) / jnp.float32(var.shape[-1])
    o_ref[0, 0] = jnp.float32(lambda_loss_var) / (mean_var + jnp.float32(1e-6))


def svd_l(x, lambda_loss_var=1.0, tile_n=None):
    """x: (N, C) array (any float dtype) -> scalar float32 loss."""
    n, c = x.shape
    itemsize = x.dtype.itemsize

    # ---- generation-aware tiling -------------------------------------------
    try:
        vmem_cap = int(pltpu.get_tpu_info().vmem_capacity_bytes)
    except Exception:
        vmem_cap = 0
    if vmem_cap <= 0:
        vmem_cap = 64 * 1024 * 1024  # v7x worst case
    # ~12.8 MiB tiles on v7x (64 MiB VMEM), 16 MiB on v5e/v6e (128 MiB VMEM).
    tile_bytes_target = min(16 << 20, max(4 << 20, vmem_cap // 5))

    # TODO(synk): very wide C (one row exceeding the tile budget) would need a
    # second grid axis over C with per-C-block partials; not needed here.
    if tile_n is None:
        bytes_per_row = max(1, c * itemsize)
        tile_n = max(32, tile_bytes_target // bytes_per_row)
    if tile_n >= n:
        tile_n = n                                   # single block == full array dims
    else:
        tile_n = max(32, (tile_n // 32) * 32)        # sublane-pack aligned (f32/bf16/i8)
        if tile_n >= n:
            tile_n = n

    num_blocks = pl.cdiv(n, tile_n)
    num_parts = 2 if num_blocks >= 2 else 1          # shard N over both TCs on v7x
    steps = pl.cdiv(num_blocks, num_parts)
    need_mask = (num_parts * steps * tile_n) != n    # partial or padding tiles exist
    last_block = num_blocks - 1

    tile_bytes = tile_n * c * itemsize
    vmem_limit = max(32 << 20, 2 * tile_bytes + (8 << 20))   # 2x-buffered tile + slack
    vmem_limit = int(min(vmem_limit, vmem_cap * 3 // 4))

    partial_kernel = functools.partial(
        _svd_l_partial_kernel, total_n=n, tile_n=tile_n,
        steps_per_part=steps, need_mask=need_mask)

    sums, sqs = pl.pallas_call(
        partial_kernel,
        out_shape=(jax.ShapeDtypeStruct((num_parts, 8, c), jnp.float32),
                   jax.ShapeDtypeStruct((num_parts, 8, c), jnp.float32)),
        grid_spec=pltpu.PrefetchScalarGridSpec(
            num_scalar_prefetch=0,
            grid=(num_parts, steps),
            in_specs=[pl.BlockSpec(
                (tile_n, c),
                # Padding tiles past the last real block are clamped onto it;
                # the kernel masks all of their rows to zero.
                lambda p, i: (jnp.minimum(p * steps + i, last_block), 0))],
            out_specs=[pl.BlockSpec((1, 8, c), lambda p, i: (p, 0, 0)),
                       pl.BlockSpec((1, 8, c), lambda p, i: (p, 0, 0))],
        ),
        compiler_params=pltpu.CompilerParams(
            dimension_semantics=("parallel", "arbitrary"),
            vmem_limit_bytes=vmem_limit),
        cost_estimate=pl.CostEstimate(
            flops=3 * n * c,
            transcendentals=0,
            bytes_accessed=n * c * itemsize + 2 * num_parts * 8 * c * 4),
    )(x)

    finalize_kernel = functools.partial(
        _svd_l_finalize_kernel, total_n=n, lambda_loss_var=float(lambda_loss_var))

    out = pl.pallas_call(
        finalize_kernel,
        out_shape=jax.ShapeDtypeStruct((1, 1), jnp.float32),
        grid_spec=pltpu.PrefetchScalarGridSpec(
            num_scalar_prefetch=0,
            grid=(1,),
            in_specs=[pl.BlockSpec((num_parts, 8, c), lambda i: (0, 0, 0)),
                      pl.BlockSpec((num_parts, 8, c), lambda i: (0, 0, 0))],
            out_specs=pl.BlockSpec((1, 1), lambda i: (0, 0),
                                   memory_space=pltpu.MemorySpace.SMEM),
        ),
        compiler_params=pltpu.CompilerParams(dimension_semantics=("arbitrary",)),
    )(sums, sqs)
    return out[0, 0]


def _svd_l_ref(x, lambda_loss_var=1.0):
    # Pure-JAX reference mirroring the torch module.
    xf = x.astype(jnp.float32)
    var = jnp.var(xf, axis=0, ddof=1)  # torch.var default is unbiased
    return jnp.float32(lambda_loss_var) / (jnp.mean(var) + jnp.float32(1e-6))


if __name__ == "__main__":
    key = jax.random.PRNGKey(0)
    k1, k2, k3 = jax.random.split(key, 3)
    lam = 2.0  # stands in for args.lambda_loss_var

    def close(a, b, tol=2e-4):
        return abs(float(a) - float(b)) <= tol * max(1.0, abs(float(b)))

    # (N, C) = (64, 32): single full-array block path.
    x = jax.random.normal(k1, (64, 32), dtype=jnp.float32)
    ref = _svd_l_ref(x, lam)
    out = jax.block_until_ready(svd_l(x, lam))
    assert jnp.isfinite(out), "non-finite loss"
    assert close(out, ref), (float(out), float(ref))

    # Forced small tiles: exercises the 2-part parallel grid, the partial
    # last tile and the clamped padding tile (3 blocks split over 2 parts).
    x2 = jax.random.normal(k2, (70, 32), dtype=jnp.float32)
    ref2 = _svd_l_ref(x2, lam)
    out2 = jax.block_until_ready(svd_l(x2, lam, tile_n=32))
    assert close(out2, ref2), (float(out2), float(ref2))

    # bf16 input: cast to f32 happens inside the kernel (half the DMA bytes).
    xb = x.astype(jnp.bfloat16)
    ref3 = _svd_l_ref(xb, lam)
    out3 = jax.block_until_ready(svd_l(xb, lam))
    assert close(out3, ref3), (float(out3), float(ref3))

    # Tiny N (< 8): single non-8-aligned full-array block fallback path.
    x4 = jax.random.normal(k3, (5, 32), dtype=jnp.float32)
    ref4 = _svd_l_ref(x4, lam)
    out4 = jax.block_until_ready(svd_l(x4, lam))
    assert close(out4, ref4), (float(out4), float(ref4))

    print("KERNEL_OK")
</pallas_src>

<mosaic_0001>
module attributes {stable_mosaic.version = 11 : i64} {
  func.func @_svd_l_partial_kernel(%arg0: i32, %arg1: i32, %arg2: memref<64x32xf32, #tpu.memory_space<vmem>>, %arg3: memref<1x8x32xf32, #tpu.memory_space<vmem>>, %arg4: memref<1x8x32xf32, #tpu.memory_space<vmem>>) attributes {dimension_semantics = [#tpu.dimension_semantics<parallel>, #tpu.dimension_semantics<arbitrary>], iteration_bounds = array<i64: 1, 1>, scalar_prefetch = 0 : i64, scratch_operands = 0 : i64, tpu.core_type = #tpu.core_type<tc>, window_params = [{transform_indices = @transform_0, window_bounds = array<i64: 64, 32>}, {transform_indices = @transform_1, window_bounds = array<i64: 1, 8, 32>}, {transform_indices = @transform_2, window_bounds = array<i64: 1, 8, 32>}]} {
    %c0_i32 = arith.constant 0 : i32
    %0 = arith.cmpi eq, %arg1, %c0_i32 : i32
    %1 = arith.extui %0 : i1 to i32
    %c0_i32_0 = arith.constant 0 : i32
    %2 = arith.cmpi ne, %1, %c0_i32_0 : i32
    scf.if %2 {
      %cst_15 = arith.constant 0.000000e+00 : f32
      %20 = vector.broadcast %cst_15 : f32 to vector<1x8x32xf32>
      %c0_16 = arith.constant 0 : index
      %c0_17 = arith.constant 0 : index
      %c0_18 = arith.constant 0 : index
      %21 = vector.load %arg3[%c0_16, %c0_17, %c0_18] : memref<1x8x32xf32, #tpu.memory_space<vmem>>, vector<1x8x32xf32>
      tpu.vector_store %arg3[%c0_16, %c0_17, %c0_18], %20 {strides = array<i32>} : memref<1x8x32xf32, #tpu.memory_space<vmem>>, vector<1x8x32xf32>,
      %cst_19 = arith.constant 0.000000e+00 : f32
      %22 = vector.broadcast %cst_19 : f32 to vector<1x8x32xf32>
      %c0_20 = arith.constant 0 : index
      %c0_21 = arith.constant 0 : index
      %c0_22 = arith.constant 0 : index
      %23 = vector.load %arg4[%c0_20, %c0_21, %c0_22] : memref<1x8x32xf32, #tpu.memory_space<vmem>>, vector<1x8x32xf32>
      tpu.vector_store %arg4[%c0_20, %c0_21, %c0_22], %22 {strides = array<i32>} : memref<1x8x32xf32, #tpu.memory_space<vmem>>, vector<1x8x32xf32>,
    } else {
    }
    %c0 = arith.constant 0 : index
    %c0_1 = arith.constant 0 : index
    %3 = vector.load %arg2[%c0, %c0_1] : memref<64x32xf32, #tpu.memory_space<vmem>>, vector<64x32xf32>
    %4 = vector.shape_cast %3 : vector<64x32xf32> to vector<8x8x32xf32>
    %c0_2 = arith.constant 0 : index
    %c0_3 = arith.constant 0 : index
    %c0_4 = arith.constant 0 : index
    %5 = vector.load %arg3[%c0_2, %c0_3, %c0_4] : memref<1x8x32xf32, #tpu.memory_space<vmem>>, vector<1x8x32xf32>
    %6 = vector.shape_cast %5 : vector<1x8x32xf32> to vector<8x32xf32>
    %cst = arith.constant dense<0.000000e+00> : vector<8x32xf32>
    %7 = vector.multi_reduction <add>, %4, %cst [0] : vector<8x8x32xf32> to vector<8x32xf32>
    %8 = arith.addf %6, %7 : vector<8x32xf32>
    %c0_5 = arith.constant 0 : index
    %c0_6 = arith.constant 0 : index
    %c0_7 = arith.constant 0 : index
    %9 = vector.load %arg3[%c0_5, %c0_6, %c0_7] : memref<1x8x32xf32, #tpu.memory_space<vmem>>, vector<1x8x32xf32>
    %10 = vector.shape_cast %9 : vector<1x8x32xf32> to vector<8x32xf32>
    %11 = vector.shape_cast %8 : vector<8x32xf32> to vector<1x8x32xf32>
    tpu.vector_store %arg3[%c0_5, %c0_6, %c0_7], %11 {strides = array<i32>} : memref<1x8x32xf32, #tpu.memory_space<vmem>>, vector<1x8x32xf32>,
    %c0_8 = arith.constant 0 : index
    %c0_9 = arith.constant 0 : index
    %c0_10 = arith.constant 0 : index
    %12 = vector.load %arg4[%c0_8, %c0_9, %c0_10] : memref<1x8x32xf32, #tpu.memory_space<vmem>>, vector<1x8x32xf32>
    %13 = vector.shape_cast %12 : vector<1x8x32xf32> to vector<8x32xf32>
    %14 = arith.mulf %4, %4 : vector<8x8x32xf32>
    %cst_11 = arith.constant dense<0.000000e+00> : vector<8x32xf32>
    %15 = vector.multi_reduction <add>, %14, %cst_11 [0] : vector<8x8x32xf32> to vector<8x32xf32>
    %16 = arith.addf %13, %15 : vector<8x32xf32>
    %c0_12 = arith.constant 0 : index
    %c0_13 = arith.constant 0 : index
    %c0_14 = arith.constant 0 : index
    %17 = vector.load %arg4[%c0_12, %c0_13, %c0_14] : memref<1x8x32xf32, #tpu.memory_space<vmem>>, vector<1x8x32xf32>
    %18 = vector.shape_cast %17 : vector<1x8x32xf32> to vector<8x32xf32>
    %19 = vector.shape_cast %16 : vector<8x32xf32> to vector<1x8x32xf32>
    tpu.vector_store %arg4[%c0_12, %c0_13, %c0_14], %19 {strides = array<i32>} : memref<1x8x32xf32, #tpu.memory_space<vmem>>, vector<1x8x32xf32>,
    return
  }
  func.func @transform_0(%arg0: i32, %arg1: i32) -> (i32, i32) {
    %c1_i32 = arith.constant 1 : i32
    %0 = arith.muli %arg0, %c1_i32 : i32
    %1 = arith.addi %0, %arg1 : i32
    %c0_i32 = arith.constant 0 : i32
    %2 = arith.minsi %1, %c0_i32 : i32
    %c0_i32_0 = arith.constant 0 : i32
    %c0_i32_1 = arith.constant 0 : i32
    return %2, %c0_i32_0 : i32, i32
  }
  func.func @transform_1(%arg0: i32, %arg1: i32) -> (i32, i32, i32) {
    %c0_i32 = arith.constant 0 : i32
    %c0_i32_0 = arith.constant 0 : i32
    %c0_i32_1 = arith.constant 0 : i32
    return %arg0, %c0_i32, %c0_i32_0 : i32, i32, i32
  }
  func.func @transform_2(%arg0: i32, %arg1: i32) -> (i32, i32, i32) {
    %c0_i32 = arith.constant 0 : i32
    %c0_i32_0 = arith.constant 0 : i32
    %c0_i32_1 = arith.constant 0 : i32
    return %arg0, %c0_i32, %c0_i32_0 : i32, i32, i32
  }
}

</mosaic_0001>

<llo_original>
// kernel: tpu_custom_call.1
$region0: #{tpu_custom_call.1}
  #allocation0 [shape = 'u32[]', space=smem, size = 0x4, offset = 0x4, fixed_abs, tag = 'smem constant byte address 0x4 - core index']
  #allocation1 [shape = 'u32[72,128]{1,0:T(1,128)}', space=vmem, size = 0x9000, scoped, tag = 'internal scratch']
  %s0 = inlined_call_operand.vmem [shape: f32[64,32], index: 0, kind: input, shape index: {}]
  %s1 = inlined_call_operand.hbm [shape: f32[1,8,32], index: 1, kind: output, shape index: {0}]
  %s2 = inlined_call_operand.hbm [shape: f32[1,8,32], index: 2, kind: output, shape index: {1}]
  %3 = xla_tuple %s1, %s2
  %s4 = sld [smem:[#allocation0]]
  $region26: #{tpu_custom_call.1} parent=0
    _
  %s6 = ssub.s32 1, %s4
  %s7 = scalar_select 0, %s6, %s4
  $region1: #{tpu_custom_call.1} parent=0
    #allocation2 [shape = 'u8[4096]{0}', space=vmem, size = 0x1000, scoped, tag = 'output window, operand 0, single buffered']
    #allocation3 [shape = 's32[1]{0}', space=sflag, size = 0x4, scoped, tag = 'scoped memory for tpu_custom_call.1']
    #allocation4 [shape = 'u8[4096]{0}', space=vmem, size = 0x1000, scoped, tag = 'output window, operand 1, single buffered']
    #allocation5 [shape = 's32[1]{0}', space=sflag, size = 0x4, scoped, tag = 'scoped memory for tpu_custom_call.1']
    %8 = vsyncpa [#allocation3], 0
    %9 = vsyncpa [#allocation5], 0
    // Predicated region
    $region2: #{tpu_custom_call.1} parent=1 // pred_check
      _
    $region3: #{tpu_custom_call.1} parent=1 // pred_check_branch
      %11 = sbr.rel (0) target = $region5
    $region4: #{tpu_custom_call.1} parent=1 // pred_region
      %s12 = sadd.s32 0, 0
      %p13 = scmp.lt.s32.totalorder %s12, 0
      %s14 = scalar_select %p13, %s12, 0
      %s15 = smul.u32 8, %s14
      %p16 = scmp.lt.s32.totalorder %s15, 7
      %s17 = scalar_select %p16, %s15, 7
      %s18 = smul.addr %s17, 8
      %s19 = scalar_lea.vmem %s0, %s18
      %s20 = sadd.s32 0, 0
      %p21 = scmp.lt.s32.totalorder %s20, 0
      %s22 = scalar_select %p21, %s20, 0
      %s23 = smul.u32 8, %s22
    $region5: #{tpu_custom_call.1} parent=1 // pred_fallthru
      _
    %s24 = sadd.s32 0, 0
    %p25 = scmp.lt.s32.totalorder %s24, 0
    %s26 = scalar_select %p25, %s24, 0
    %s27 = smul.u32 8, %s26
    %p28 = scmp.lt.s32.totalorder %s27, 7
    %s29 = scalar_select %p28, %s27, 7
    %s30 = smul.addr %s29, 8
    %s31 = scalar_lea.vmem %s0, %s30
    %s32 = sadd.s32 0, 0
    %p33 = scmp.lt.s32.totalorder %s32, 0
    %s34 = scalar_select %p33, %s32, 0
    %s35 = smul.u32 8, %s34
    %p36 = scmp.lt.s32.totalorder %s35, 7
    %s37 = scalar_select %p36, %s35, 7
    %s38 = smul.addr %s37, 8
    %s39 = scalar_lea.vmem %s0, %s38
    %s40 = sadd.s32 0, 0
    %p41 = scmp.lt.s32.totalorder %s40, 0
    %s42 = scalar_select %p41, %s40, 0
    %s43 = smul.u32 8, %s42
    %p44 = scmp.eq.s32.totalorder 0, 0
    // Predicated region
    $region6: #{tpu_custom_call.1} parent=1 // pred_check
      %p45 = pneg %p44
    $region7: #{tpu_custom_call.1} parent=1 // pred_check_branch
      %47 = sbr.rel (%p45) target = $region9
    $region8: #{tpu_custom_call.1} parent=1 // pred_region
      %vm48 = vcmask 261120
      %49 = vst.msk [vmem:[#allocation2] sm:$0xff] %vm48, 0.0
      %50 = vst.msk [vmem:[#allocation4] sm:$0xff] %vm48, 0.0
    $region9: #{tpu_custom_call.1} parent=1 // pred_fallthru
      _
    %v51 = vld [vmem:[%s39] sm:$0xff]
    %v52 = vld [vmem:[%s39 + $0x8] sm:$0xff]
    %v53 = vld [vmem:[%s39 + $0x10] sm:$0xff]
    %v54 = vld [vmem:[%s39 + $0x18] sm:$0xff]
    %v55 = vld [vmem:[%s39 + $0x20] sm:$0xff]
    %v56 = vld [vmem:[%s39 + $0x28] sm:$0xff]
    %v57 = vld [vmem:[%s39 + $0x30] sm:$0xff]
    %v58 = vld [vmem:[%s39 + $0x38] sm:$0xff]
    %v59 = vld [vmem:[#allocation2] sm:$0xff]
    %vm60 = vcmask 261120
    %v61 = vsel %vm60, %v51, 0.0
    %v62 = vsel %vm60, %v52, 0.0
    %v63 = vadd.f32 %v61, %v62
    %v64 = vsel %vm60, %v53, 0.0
    %v65 = vadd.f32 %v63, %v64
    %v66 = vsel %vm60, %v54, 0.0
    %v67 = vadd.f32 %v65, %v66
    %v68 = vsel %vm60, %v55, 0.0
    %v69 = vadd.f32 %v67, %v68
    %v70 = vsel %vm60, %v56, 0.0
    %v71 = vadd.f32 %v69, %v70
    %v72 = vsel %vm60, %v57, 0.0
    %v73 = vadd.f32 %v71, %v72
    %v74 = vsel %vm60, %v58, 0.0
    %v75 = vadd.f32 %v73, %v74
    %v76 = vadd.f32 %v59, %v75
    %77 = vst.msk [vmem:[#allocation2] sm:$0xff] %vm60, %v76
    %v78 = vld [vmem:[#allocation4] sm:$0xff]
    %v79 = vmul.f32 %v51, %v51
    %v80 = vmul.f32 %v52, %v52
    %v81 = vmul.f32 %v53, %v53
    %v82 = vmul.f32 %v54, %v54
    %v83 = vmul.f32 %v55, %v55
    %v84 = vmul.f32 %v56, %v56
    %v85 = vmul.f32 %v57, %v57
    %v86 = vmul.f32 %v58, %v58
    %v87 = vsel %vm60, %v79, 0.0
    %v88 = vsel %vm60, %v80, 0.0
    %v89 = vadd.f32 %v87, %v88
    %v90 = vsel %vm60, %v81, 0.0
    %v91 = vadd.f32 %v89, %v90
    %v92 = vsel %vm60, %v82, 0.0
    %v93 = vadd.f32 %v91, %v92
    %v94 = vsel %vm60, %v83, 0.0
    %v95 = vadd.f32 %v93, %v94
    %v96 = vsel %vm60, %v84, 0.0
    %v97 = vadd.f32 %v95, %v96
    %v98 = vsel %vm60, %v85, 0.0
    %v99 = vadd.f32 %v97, %v98
    %v100 = vsel %vm60, %v86, 0.0
    %v101 = vadd.f32 %v99, %v100
    %v102 = vadd.f32 %v78, %v101
    %103 = vst.msk [vmem:[#allocation4] sm:$0xff] %vm60, %v102
    // Predicated region
    $region10: #{tpu_custom_call.1} parent=1 // pred_check
      _
    $region11: #{tpu_custom_call.1} parent=1 // pred_check_branch
      %105 = sbr.rel (0) target = $region13
    $region12: #{tpu_custom_call.1} parent=1 // pred_region
      %107 = vsyncadd [#allocation3], 0
      %s109 = sshll.u32 [#allocation2], 4
      %s110 = int_to_ptr.vmem [resolvable:$true] %s109
      %s111 = sshll.u32 %s1, 4
      %s112 = int_to_ptr.hbm [resolvable:$true] %s111
      %114 = dma.vmem_to_hbm [thread:$0]  %s110, 128, %s112, [#allocation3]
    $region13: #{tpu_custom_call.1} parent=1 // pred_fallthru
      _
    // Predicated region
    $region14: #{tpu_custom_call.1} parent=1 // pred_check
      _
    $region15: #{tpu_custom_call.1} parent=1 // pred_check_branch
      %116 = sbr.rel (0) target = $region17
    $region16: #{tpu_custom_call.1} parent=1 // pred_region
      %118 = vsyncadd [#allocation5], 0
      %s120 = sshll.u32 [#allocation4], 4
      %s121 = int_to_ptr.vmem [resolvable:$true] %s120
      %s122 = sshll.u32 %s2, 4
      %s123 = int_to_ptr.hbm [resolvable:$true] %s122
      %125 = dma.vmem_to_hbm [thread:$0]  %s121, 128, %s123, [#allocation5]
    $region17: #{tpu_custom_call.1} parent=1 // pred_fallthru
      _
    // Predicated region
    $region18: #{tpu_custom_call.1} parent=1 // pred_check
      _
    $region19: #{tpu_custom_call.1} parent=1 // pred_check_branch
      %127 = sbr.rel (0) target = $region21
    $region20: #{tpu_custom_call.1} parent=1 // pred_region
      %129 = dma.done [#allocation3], 128
    $region21: #{tpu_custom_call.1} parent=1 // pred_fallthru
      _
    // Predicated region
    $region22: #{tpu_custom_call.1} parent=1 // pred_check
      _
    $region23: #{tpu_custom_call.1} parent=1 // pred_check_branch
      %131 = sbr.rel (0) target = $region25
    $region24: #{tpu_custom_call.1} parent=1 // pred_region
      %133 = dma.done [#allocation5], 128
    $region25: #{tpu_custom_call.1} parent=1 // pred_fallthru
      _
    %134 = vsyncpa [#allocation3], 1
    %135 = vsyncpa [#allocation5], 1

</llo_original>
